<compile_context>
chip_gen: v7x
topology: tpu7x:2x2x1
jax: 0.10.0
libtpu: 0.0.40
codegen_flags: <defaults>
</compile_context>

<pallas_src>
import functools

import jax
import jax.numpy as jnp
from jax import lax
from jax.experimental import pallas as pl
from jax.experimental.pallas import tpu as pltpu

KSIZE = 3
PAD = KSIZE // 2


def _conv_relu_kernel(x_ref, w_ref, m_ref, b_ref, o_ref, *, H, W, use_bf16):
    # x_ref: (N*Cin,  H*W)        batch+channel on sublanes, spatial on lanes
    # w_ref: (9, N*Cout, N*Cin)   per-tap, block-diagonal over the batch
    # m_ref: (9, 1, H*W)          per-tap "same"-padding masks (0/1, f32)
    # b_ref: (N*Cout, 1)
    # o_ref: (N*Cout, H*W)        lane-dense output (multiple of 128 lanes)
    HW = H * W
    x = x_ref[...]                                        # (N*Cin, HW) f32
    acc = jnp.zeros((w_ref.shape[1], HW), jnp.float32)    # (N*Cout, HW)

    k = 0
    for kh in range(KSIZE):                               # static unroll: 9 taps
        for kw in range(KSIZE):
            dy, dx = kh - PAD, kw - PAD
            d = dy * W + dx                               # flat lane offset of tap
            # XLU lane roll brings pixel (y+dy, x+dx) onto output lane (y, x);
            # the precomputed mask zeroes out-of-image (wrapped) lanes.
            shifted = x if d == 0 else pltpu.roll(x, shift=(-d) % HW, axis=1)
            tap = shifted if d == 0 else shifted * m_ref[k]   # (N*Cin, HW) f32
            if use_bf16:                                  # v6e/v7x MXU fast path
                tap = tap.astype(jnp.bfloat16)
            acc = acc + jnp.dot(w_ref[k], tap,
                                preferred_element_type=jnp.float32)
            k += 1

    # Fused bias + ReLU; unmasked lane-dense store.
    o_ref[...] = jnp.maximum(acc + b_ref[...], 0.0).astype(o_ref.dtype)


def rnn_conv_block(x_nchw, weight_oihw, bias, *, use_bf16_mxu=False):
    """Forward of RnnConvBlock: conv2d(k=3, 'same' padding, bias) + ReLU.

    Args:
      x_nchw:       (N, Cin, H, W)     float32
      weight_oihw:  (Cout, Cin, 3, 3)  float32
      bias:         (Cout,)            float32
      use_bf16_mxu: narrow MXU operands to bf16 (v6e/v7x); f32 accumulation.
    Returns:
      (N, Cout, H, W) float32
    """
    N, Cin, H, W = x_nchw.shape
    Cout = weight_oihw.shape[0]
    HW = H * W
    NCin, NCout = N * Cin, N * Cout
    K2 = KSIZE * KSIZE

    # Free metadata reshape (NCHW is already (n, ci)-major / spatially contiguous).
    x2d = x_nchw.reshape(NCin, HW)

    # Per-tap weights (9, Cout, Cin), block-diagonal over the batch so a single
    # contraction handles all images:
    #   w_big[k, n*Cout+o, m*Cin+i] = delta(n, m) * W[o, i, kh, kw]
    w_taps = jnp.transpose(weight_oihw, (2, 3, 0, 1)).reshape(K2, Cout, Cin)
    eye = jnp.eye(N, dtype=w_taps.dtype)
    w_big = jnp.einsum("nm,koi->knomi", eye, w_taps).reshape(K2, NCout, NCin)
    if use_bf16_mxu:
        w_big = w_big.astype(jnp.bfloat16)   # operands only; accumulation stays f32

    b_big = jnp.tile(bias, (N,)).reshape(NCout, 1)

    # Precomputed "same"-padding masks, one per tap (resident like the weights).
    yy, xx = jnp.meshgrid(jnp.arange(H), jnp.arange(W), indexing="ij")
    mask_rows = []
    for kh in range(KSIZE):
        for kw in range(KSIZE):
            dy, dx = kh - PAD, kw - PAD
            valid = ((yy + dy >= 0) & (yy + dy < H)
                     & (xx + dx >= 0) & (xx + dx < W))
            mask_rows.append(valid.reshape(1, HW))
    masks = jnp.stack(mask_rows, axis=0).astype(jnp.float32)   # (9, 1, HW)

    kernel = functools.partial(_conv_relu_kernel, H=H, W=W, use_bf16=use_bf16_mxu)

    flops = 2 * K2 * NCout * NCin * HW
    bytes_accessed = 4 * (NCin * HW + K2 * (NCout * NCin + HW)
                          + NCout + NCout * HW)

    out2d = pl.pallas_call(
        kernel,
        out_shape=jax.ShapeDtypeStruct((NCout, HW), x_nchw.dtype),
        grid=(1,),   # whole batch in a single step (problem is fixed-overhead bound)
        in_specs=[
            pl.BlockSpec((NCin, HW), lambda i: (0, 0)),
            pl.BlockSpec((K2, NCout, NCin), lambda i: (0, 0, 0)),
            pl.BlockSpec((K2, 1, HW), lambda i: (0, 0, 0)),
            pl.BlockSpec((NCout, 1), lambda i: (0, 0)),
        ],
        out_specs=pl.BlockSpec((NCout, HW), lambda i: (0, 0)),
        compiler_params=pltpu.CompilerParams(
            dimension_semantics=("arbitrary",)),
        cost_estimate=pl.CostEstimate(
            flops=flops, transcendentals=0, bytes_accessed=bytes_accessed),
    )(x2d, w_big, masks, b_big)

    # Free metadata reshape back to NCHW (row n*Cout + co -> out[n, co]).
    return out2d.reshape(N, Cout, H, W)


def _reference(x_nchw, weight_oihw, bias):
    out = lax.conv_general_dilated(
        x_nchw, weight_oihw,
        window_strides=(1, 1),
        padding=((PAD, PAD), (PAD, PAD)),
        dimension_numbers=("NCHW", "OIHW", "NCHW"))
    out = out + bias[None, :, None, None]
    return jnp.maximum(out, 0.0)


if __name__ == "__main__":
    key = jax.random.PRNGKey(0)
    k1, k2, k3 = jax.random.split(key, 3)

    N, Cin, Cout, H, W = 2, 4, 8, 16, 16

    x = jax.random.normal(k1, (N, Cin, H, W), dtype=jnp.float32)
    weight = jax.random.normal(k2, (Cout, Cin, KSIZE, KSIZE),
                               dtype=jnp.float32) * 0.1
    bias = jax.random.normal(k3, (Cout,), dtype=jnp.float32) * 0.1

    ref = jax.block_until_ready(_reference(x, weight, bias))

    # Default path: f32 MXU operands (exact module semantics).
    out = jax.block_until_ready(rnn_conv_block(x, weight, bias))
    assert out.shape == (N, Cout, H, W)
    assert jnp.allclose(out, ref, atol=1e-4, rtol=1e-4), "f32 path mismatch vs reference"

    # v6e/v7x fast path: bf16 MXU operands, f32 accumulation (looser tolerance).
    out_bf16 = jax.block_until_ready(
        rnn_conv_block(x, weight, bias, use_bf16_mxu=True))
    assert out_bf16.shape == (N, Cout, H, W)
    assert jnp.allclose(out_bf16, ref, atol=5e-2, rtol=5e-2), "bf16 path mismatch vs reference"

    print("KERNEL_OK")
</pallas_src>

<mosaic_0001>
module attributes {stable_mosaic.version = 11 : i64} {
  func.func @_conv_relu_kernel(%arg0: i32, %arg1: memref<8x256xf32, #tpu.memory_space<vmem>>, %arg2: memref<9x16x8xf32, #tpu.memory_space<vmem>>, %arg3: memref<9x1x256xf32, #tpu.memory_space<vmem>>, %arg4: memref<16x1xf32, #tpu.memory_space<vmem>>, %arg5: memref<16x256xf32, #tpu.memory_space<vmem>>) attributes {dimension_semantics = [#tpu.dimension_semantics<arbitrary>], iteration_bounds = array<i64: 1>, scalar_prefetch = 0 : i64, scratch_operands = 0 : i64, tpu.core_type = #tpu.core_type<tc>, window_params = [{pipeline_mode = #tpu.pipeline_mode<synchronous>, transform_indices = @transform_0, window_bounds = array<i64: 8, 256>}, {pipeline_mode = #tpu.pipeline_mode<synchronous>, transform_indices = @transform_1, window_bounds = array<i64: 9, 16, 8>}, {pipeline_mode = #tpu.pipeline_mode<synchronous>, transform_indices = @transform_2, window_bounds = array<i64: 9, 1, 256>}, {pipeline_mode = #tpu.pipeline_mode<synchronous>, transform_indices = @transform_3, window_bounds = array<i64: 16, 1>}, {pipeline_mode = #tpu.pipeline_mode<synchronous>, transform_indices = @transform_4, window_bounds = array<i64: 16, 256>}]} {
    %c0 = arith.constant 0 : index
    %c0_0 = arith.constant 0 : index
    %0 = vector.load %arg1[%c0, %c0_0] : memref<8x256xf32, #tpu.memory_space<vmem>>, vector<8x256xf32>
    %cst = arith.constant 0.000000e+00 : f32
    %1 = vector.broadcast %cst : f32 to vector<16x256xf32>
    %c17_i32 = arith.constant 17 : i32
    %2 = tpu.dynamic_rotate %0 by %c17_i32 dim 1 : vector<8x256xf32>, i32 -> vector<8x256xf32>
    %c0_1 = arith.constant 0 : index
    %c0_2 = arith.constant 0 : index
    %c0_3 = arith.constant 0 : index
    %3 = vector.load %arg3[%c0_1, %c0_2, %c0_3] : memref<9x1x256xf32, #tpu.memory_space<vmem>>, vector<1x1x256xf32>
    %4 = vector.shape_cast %3 : vector<1x1x256xf32> to vector<1x256xf32>
    %5 = vector.broadcast %4 : vector<1x256xf32> to vector<8x256xf32>
    %6 = arith.mulf %2, %5 : vector<8x256xf32>
    %c0_4 = arith.constant 0 : index
    %c0_5 = arith.constant 0 : index
    %c0_6 = arith.constant 0 : index
    %7 = vector.load %arg2[%c0_4, %c0_5, %c0_6] : memref<9x16x8xf32, #tpu.memory_space<vmem>>, vector<1x16x8xf32>
    %8 = vector.shape_cast %7 : vector<1x16x8xf32> to vector<16x8xf32>
    %cst_7 = arith.constant dense<0.000000e+00> : vector<16x256xf32>
    %9 = tpu.matmul %8, %6, %cst_7 {dimension_numbers = #tpu.dot_dimension_numbers<[1], [0], [0], [1], [0, 0, 1, 1], [], []>} : vector<16x8xf32>, vector<8x256xf32>, vector<16x256xf32> -> vector<16x256xf32>
    %10 = arith.addf %1, %9 : vector<16x256xf32>
    %c16_i32 = arith.constant 16 : i32
    %11 = tpu.dynamic_rotate %0 by %c16_i32 dim 1 : vector<8x256xf32>, i32 -> vector<8x256xf32>
    %c1 = arith.constant 1 : index
    %c0_8 = arith.constant 0 : index
    %c0_9 = arith.constant 0 : index
    %12 = vector.load %arg3[%c1, %c0_8, %c0_9] : memref<9x1x256xf32, #tpu.memory_space<vmem>>, vector<1x1x256xf32>
    %13 = vector.shape_cast %12 : vector<1x1x256xf32> to vector<1x256xf32>
    %14 = vector.broadcast %13 : vector<1x256xf32> to vector<8x256xf32>
    %15 = arith.mulf %11, %14 : vector<8x256xf32>
    %c1_10 = arith.constant 1 : index
    %c0_11 = arith.constant 0 : index
    %c0_12 = arith.constant 0 : index
    %16 = vector.load %arg2[%c1_10, %c0_11, %c0_12] : memref<9x16x8xf32, #tpu.memory_space<vmem>>, vector<1x16x8xf32>
    %17 = vector.shape_cast %16 : vector<1x16x8xf32> to vector<16x8xf32>
    %cst_13 = arith.constant dense<0.000000e+00> : vector<16x256xf32>
    %18 = tpu.matmul %17, %15, %cst_13 {dimension_numbers = #tpu.dot_dimension_numbers<[1], [0], [0], [1], [0, 0, 1, 1], [], []>} : vector<16x8xf32>, vector<8x256xf32>, vector<16x256xf32> -> vector<16x256xf32>
    %19 = arith.addf %10, %18 : vector<16x256xf32>
    %c15_i32 = arith.constant 15 : i32
    %20 = tpu.dynamic_rotate %0 by %c15_i32 dim 1 : vector<8x256xf32>, i32 -> vector<8x256xf32>
    %c2 = arith.constant 2 : index
    %c0_14 = arith.constant 0 : index
    %c0_15 = arith.constant 0 : index
    %21 = vector.load %arg3[%c2, %c0_14, %c0_15] : memref<9x1x256xf32, #tpu.memory_space<vmem>>, vector<1x1x256xf32>
    %22 = vector.shape_cast %21 : vector<1x1x256xf32> to vector<1x256xf32>
    %23 = vector.broadcast %22 : vector<1x256xf32> to vector<8x256xf32>
    %24 = arith.mulf %20, %23 : vector<8x256xf32>
    %c2_16 = arith.constant 2 : index
    %c0_17 = arith.constant 0 : index
    %c0_18 = arith.constant 0 : index
    %25 = vector.load %arg2[%c2_16, %c0_17, %c0_18] : memref<9x16x8xf32, #tpu.memory_space<vmem>>, vector<1x16x8xf32>
    %26 = vector.shape_cast %25 : vector<1x16x8xf32> to vector<16x8xf32>
    %cst_19 = arith.constant dense<0.000000e+00> : vector<16x256xf32>
    %27 = tpu.matmul %26, %24, %cst_19 {dimension_numbers = #tpu.dot_dimension_numbers<[1], [0], [0], [1], [0, 0, 1, 1], [], []>} : vector<16x8xf32>, vector<8x256xf32>, vector<16x256xf32> -> vector<16x256xf32>
    %28 = arith.addf %19, %27 : vector<16x256xf32>
    %c1_i32 = arith.constant 1 : i32
    %29 = tpu.dynamic_rotate %0 by %c1_i32 dim 1 : vector<8x256xf32>, i32 -> vector<8x256xf32>
    %c3 = arith.constant 3 : index
    %c0_20 = arith.constant 0 : index
    %c0_21 = arith.constant 0 : index
    %30 = vector.load %arg3[%c3, %c0_20, %c0_21] : memref<9x1x256xf32, #tpu.memory_space<vmem>>, vector<1x1x256xf32>
    %31 = vector.shape_cast %30 : vector<1x1x256xf32> to vector<1x256xf32>
    %32 = vector.broadcast %31 : vector<1x256xf32> to vector<8x256xf32>
    %33 = arith.mulf %29, %32 : vector<8x256xf32>
    %c3_22 = arith.constant 3 : index
    %c0_23 = arith.constant 0 : index
    %c0_24 = arith.constant 0 : index
    %34 = vector.load %arg2[%c3_22, %c0_23, %c0_24] : memref<9x16x8xf32, #tpu.memory_space<vmem>>, vector<1x16x8xf32>
    %35 = vector.shape_cast %34 : vector<1x16x8xf32> to vector<16x8xf32>
    %cst_25 = arith.constant dense<0.000000e+00> : vector<16x256xf32>
    %36 = tpu.matmul %35, %33, %cst_25 {dimension_numbers = #tpu.dot_dimension_numbers<[1], [0], [0], [1], [0, 0, 1, 1], [], []>} : vector<16x8xf32>, vector<8x256xf32>, vector<16x256xf32> -> vector<16x256xf32>
    %37 = arith.addf %28, %36 : vector<16x256xf32>
    %c4 = arith.constant 4 : index
    %c0_26 = arith.constant 0 : index
    %c0_27 = arith.constant 0 : index
    %38 = vector.load %arg2[%c4, %c0_26, %c0_27] : memref<9x16x8xf32, #tpu.memory_space<vmem>>, vector<1x16x8xf32>
    %39 = vector.shape_cast %38 : vector<1x16x8xf32> to vector<16x8xf32>
    %cst_28 = arith.constant dense<0.000000e+00> : vector<16x256xf32>
    %40 = tpu.matmul %39, %0, %cst_28 {dimension_numbers = #tpu.dot_dimension_numbers<[1], [0], [0], [1], [0, 0, 1, 1], [], []>} : vector<16x8xf32>, vector<8x256xf32>, vector<16x256xf32> -> vector<16x256xf32>
    %41 = arith.addf %37, %40 : vector<16x256xf32>
    %c255_i32 = arith.constant 255 : i32
    %42 = tpu.dynamic_rotate %0 by %c255_i32 dim 1 : vector<8x256xf32>, i32 -> vector<8x256xf32>
    %c5 = arith.constant 5 : index
    %c0_29 = arith.constant 0 : index
    %c0_30 = arith.constant 0 : index
    %43 = vector.load %arg3[%c5, %c0_29, %c0_30] : memref<9x1x256xf32, #tpu.memory_space<vmem>>, vector<1x1x256xf32>
    %44 = vector.shape_cast %43 : vector<1x1x256xf32> to vector<1x256xf32>
    %45 = vector.broadcast %44 : vector<1x256xf32> to vector<8x256xf32>
    %46 = arith.mulf %42, %45 : vector<8x256xf32>
    %c5_31 = arith.constant 5 : index
    %c0_32 = arith.constant 0 : index
    %c0_33 = arith.constant 0 : index
    %47 = vector.load %arg2[%c5_31, %c0_32, %c0_33] : memref<9x16x8xf32, #tpu.memory_space<vmem>>, vector<1x16x8xf32>
    %48 = vector.shape_cast %47 : vector<1x16x8xf32> to vector<16x8xf32>
    %cst_34 = arith.constant dense<0.000000e+00> : vector<16x256xf32>
    %49 = tpu.matmul %48, %46, %cst_34 {dimension_numbers = #tpu.dot_dimension_numbers<[1], [0], [0], [1], [0, 0, 1, 1], [], []>} : vector<16x8xf32>, vector<8x256xf32>, vector<16x256xf32> -> vector<16x256xf32>
    %50 = arith.addf %41, %49 : vector<16x256xf32>
    %c241_i32 = arith.constant 241 : i32
    %51 = tpu.dynamic_rotate %0 by %c241_i32 dim 1 : vector<8x256xf32>, i32 -> vector<8x256xf32>
    %c6 = arith.constant 6 : index
    %c0_35 = arith.constant 0 : index
    %c0_36 = arith.constant 0 : index
    %52 = vector.load %arg3[%c6, %c0_35, %c0_36] : memref<9x1x256xf32, #tpu.memory_space<vmem>>, vector<1x1x256xf32>
    %53 = vector.shape_cast %52 : vector<1x1x256xf32> to vector<1x256xf32>
    %54 = vector.broadcast %53 : vector<1x256xf32> to vector<8x256xf32>
    %55 = arith.mulf %51, %54 : vector<8x256xf32>
    %c6_37 = arith.constant 6 : index
    %c0_38 = arith.constant 0 : index
    %c0_39 = arith.constant 0 : index
    %56 = vector.load %arg2[%c6_37, %c0_38, %c0_39] : memref<9x16x8xf32, #tpu.memory_space<vmem>>, vector<1x16x8xf32>
    %57 = vector.shape_cast %56 : vector<1x16x8xf32> to vector<16x8xf32>
    %cst_40 = arith.constant dense<0.000000e+00> : vector<16x256xf32>
    %58 = tpu.matmul %57, %55, %cst_40 {dimension_numbers = #tpu.dot_dimension_numbers<[1], [0], [0], [1], [0, 0, 1, 1], [], []>} : vector<16x8xf32>, vector<8x256xf32>, vector<16x256xf32> -> vector<16x256xf32>
    %59 = arith.addf %50, %58 : vector<16x256xf32>
    %c240_i32 = arith.constant 240 : i32
    %60 = tpu.dynamic_rotate %0 by %c240_i32 dim 1 : vector<8x256xf32>, i32 -> vector<8x256xf32>
    %c7 = arith.constant 7 : index
    %c0_41 = arith.constant 0 : index
    %c0_42 = arith.constant 0 : index
    %61 = vector.load %arg3[%c7, %c0_41, %c0_42] : memref<9x1x256xf32, #tpu.memory_space<vmem>>, vector<1x1x256xf32>
    %62 = vector.shape_cast %61 : vector<1x1x256xf32> to vector<1x256xf32>
    %63 = vector.broadcast %62 : vector<1x256xf32> to vector<8x256xf32>
    %64 = arith.mulf %60, %63 : vector<8x256xf32>
    %c7_43 = arith.constant 7 : index
    %c0_44 = arith.constant 0 : index
    %c0_45 = arith.constant 0 : index
    %65 = vector.load %arg2[%c7_43, %c0_44, %c0_45] : memref<9x16x8xf32, #tpu.memory_space<vmem>>, vector<1x16x8xf32>
    %66 = vector.shape_cast %65 : vector<1x16x8xf32> to vector<16x8xf32>
    %cst_46 = arith.constant dense<0.000000e+00> : vector<16x256xf32>
    %67 = tpu.matmul %66, %64, %cst_46 {dimension_numbers = #tpu.dot_dimension_numbers<[1], [0], [0], [1], [0, 0, 1, 1], [], []>} : vector<16x8xf32>, vector<8x256xf32>, vector<16x256xf32> -> vector<16x256xf32>
    %68 = arith.addf %59, %67 : vector<16x256xf32>
    %c239_i32 = arith.constant 239 : i32
    %69 = tpu.dynamic_rotate %0 by %c239_i32 dim 1 : vector<8x256xf32>, i32 -> vector<8x256xf32>
    %c8 = arith.constant 8 : index
    %c0_47 = arith.constant 0 : index
    %c0_48 = arith.constant 0 : index
    %70 = vector.load %arg3[%c8, %c0_47, %c0_48] : memref<9x1x256xf32, #tpu.memory_space<vmem>>, vector<1x1x256xf32>
    %71 = vector.shape_cast %70 : vector<1x1x256xf32> to vector<1x256xf32>
    %72 = vector.broadcast %71 : vector<1x256xf32> to vector<8x256xf32>
    %73 = arith.mulf %69, %72 : vector<8x256xf32>
    %c8_49 = arith.constant 8 : index
    %c0_50 = arith.constant 0 : index
    %c0_51 = arith.constant 0 : index
    %74 = vector.load %arg2[%c8_49, %c0_50, %c0_51] : memref<9x16x8xf32, #tpu.memory_space<vmem>>, vector<1x16x8xf32>
    %75 = vector.shape_cast %74 : vector<1x16x8xf32> to vector<16x8xf32>
    %cst_52 = arith.constant dense<0.000000e+00> : vector<16x256xf32>
    %76 = tpu.matmul %75, %73, %cst_52 {dimension_numbers = #tpu.dot_dimension_numbers<[1], [0], [0], [1], [0, 0, 1, 1], [], []>} : vector<16x8xf32>, vector<8x256xf32>, vector<16x256xf32> -> vector<16x256xf32>
    %77 = arith.addf %68, %76 : vector<16x256xf32>
    %c0_53 = arith.constant 0 : index
    %c0_54 = arith.constant 0 : index
    %78 = vector.load %arg4[%c0_53, %c0_54] : memref<16x1xf32, #tpu.memory_space<vmem>>, vector<16x1xf32>
    %79 = vector.broadcast %78 : vector<16x1xf32> to vector<16x256xf32>
    %80 = arith.addf %77, %79 : vector<16x256xf32>
    %cst_55 = arith.constant 0.000000e+00 : f32
    %81 = vector.broadcast %cst_55 : f32 to vector<16x256xf32>
    %82 = arith.maximumf %80, %81 : vector<16x256xf32>
    %c0_56 = arith.constant 0 : index
    %c0_57 = arith.constant 0 : index
    %83 = vector.load %arg5[%c0_56, %c0_57] : memref<16x256xf32, #tpu.memory_space<vmem>>, vector<16x256xf32>
    tpu.vector_store %arg5[%c0_56, %c0_57], %82 {strides = array<i32>} : memref<16x256xf32, #tpu.memory_space<vmem>>, vector<16x256xf32>,
    return
  }
  func.func @transform_0(%arg0: i32) -> (i32, i32) {
    %c0_i32 = arith.constant 0 : i32
    %c0_i32_0 = arith.constant 0 : i32
    %c0_i32_1 = arith.constant 0 : i32
    return %c0_i32, %c0_i32_0 : i32, i32
  }
  func.func @transform_1(%arg0: i32) -> (i32, i32, i32) {
    %c0_i32 = arith.constant 0 : i32
    %c0_i32_0 = arith.constant 0 : i32
    %c0_i32_1 = arith.constant 0 : i32
    %c0_i32_2 = arith.constant 0 : i32
    return %c0_i32, %c0_i32_0, %c0_i32_1 : i32, i32, i32
  }
  func.func @transform_2(%arg0: i32) -> (i32, i32, i32) {
    %c0_i32 = arith.constant 0 : i32
    %c0_i32_0 = arith.constant 0 : i32
    %c0_i32_1 = arith.constant 0 : i32
    %c0_i32_2 = arith.constant 0 : i32
    return %c0_i32, %c0_i32_0, %c0_i32_1 : i32, i32, i32
  }
  func.func @transform_3(%arg0: i32) -> (i32, i32) {
    %c0_i32 = arith.constant 0 : i32
    %c0_i32_0 = arith.constant 0 : i32
    %c0_i32_1 = arith.constant 0 : i32
    return %c0_i32, %c0_i32_0 : i32, i32
  }
  func.func @transform_4(%arg0: i32) -> (i32, i32) {
    %c0_i32 = arith.constant 0 : i32
    %c0_i32_0 = arith.constant 0 : i32
    %c0_i32_1 = arith.constant 0 : i32
    return %c0_i32, %c0_i32_0 : i32, i32
  }
}

</mosaic_0001>

<llo_original>
// kernel: tpu_custom_call.1
$region0: #{tpu_custom_call.1}
  #allocation0 [shape = 'u32[]', space=smem, size = 0x4, offset = 0x4, fixed_abs, tag = 'smem constant byte address 0x4 - core index']
  #allocation1 [shape = 'u32[144,128]{1,0:T(1,128)}', space=vmem, size = 0x12000, scoped, tag = 'internal scratch']
  %s0 = inlined_call_operand.vmem [shape: f32[8,256], index: 0, kind: input, shape index: {}]
  %s1 = inlined_call_operand.vmem [shape: f32[9,16,8], index: 1, kind: input, shape index: {}]
  %s2 = inlined_call_operand.vmem [shape: f32[9,1,256], index: 2, kind: input, shape index: {}]
  %s3 = inlined_call_operand.vmem [shape: f32[16,1], index: 3, kind: input, shape index: {}]
  %s4 = inlined_call_operand.hbm [shape: f32[16,256], index: 4, kind: output, shape index: {}]
  %s5 = sld [smem:[#allocation0]]
  $region26: #{tpu_custom_call.1} parent=0
    _
  %s7 = ssub.s32 1, %s5
  %s8 = scalar_select 0, %s7, %s5
  $region1: #{tpu_custom_call.1} parent=0
    #allocation2 [shape = 'u8[16384]{0}', space=vmem, size = 0x4000, scoped, tag = 'output window, operand 0, single buffered']
    #allocation3 [shape = 's32[1]{0}', space=sflag, size = 0x4, scoped, tag = 'scoped memory for tpu_custom_call.1']
    %9 = vsyncpa [#allocation3], 0
    // Predicated region
    $region2: #{tpu_custom_call.1} parent=1 // pred_check
      _
    $region3: #{tpu_custom_call.1} parent=1 // pred_check_branch
      %11 = sbr.rel (0) target = $region5
    $region4: #{tpu_custom_call.1} parent=1 // pred_region
      _
    $region5: #{tpu_custom_call.1} parent=1 // pred_fallthru
      _
    // Predicated region
    $region6: #{tpu_custom_call.1} parent=1 // pred_check
      _
    $region7: #{tpu_custom_call.1} parent=1 // pred_check_branch
      %13 = sbr.rel (0) target = $region9
    $region8: #{tpu_custom_call.1} parent=1 // pred_region
      _
    $region9: #{tpu_custom_call.1} parent=1 // pred_fallthru
      _
    // Predicated region
    $region10: #{tpu_custom_call.1} parent=1 // pred_check
      _
    $region11: #{tpu_custom_call.1} parent=1 // pred_check_branch
      %15 = sbr.rel (0) target = $region13
    $region12: #{tpu_custom_call.1} parent=1 // pred_region
      _
    $region13: #{tpu_custom_call.1} parent=1 // pred_fallthru
      _
    // Predicated region
    $region14: #{tpu_custom_call.1} parent=1 // pred_check
      _
    $region15: #{tpu_custom_call.1} parent=1 // pred_check_branch
      %17 = sbr.rel (0) target = $region17
    $region16: #{tpu_custom_call.1} parent=1 // pred_region
      _
    $region17: #{tpu_custom_call.1} parent=1 // pred_fallthru
      _
    %v18 = vld [vmem:[%s0] sm:$0xff]
    %v19 = vld [vmem:[%s0 + $0x8] sm:$0xff]
    %20 = vrot.lane.b32.xlu0 %v18, 17
    %v21 = vpop.permute.xlu0 %20
    %22 = vrot.lane.b32.xlu0 %v19, 17
    %v23 = vpop.permute.xlu0 %22
    %v24 = vlaneseq
    %v25 = vand.u32 %v24, 127
    %vm26 = vcmp.lt.s32.totalorder %v25, 17
    %v27 = vsel %vm26, %v21, %v23
    %v28 = vsel %vm26, %v23, %v21
    %v29 = vld [vmem:[%s2] sm:$0x3]
    %v31 = vlaneseq
    %v32 = vshrl.u32 %v31, 7
    %v33 = vsub.s32 0, %v32
    %v34 = vrot.slane %v29, %v33
    %v35 = vlaneseq
    %v36 = vshrl.u32 %v35, 7
    %v37 = vsub.s32 1, %v36
    %v38 = vrot.slane %v29, %v37
    %v41 = vmul.f32 %v28, %v34
    %v42 = vmul.f32 %v27, %v38
    %v43 = vld [vmem:[%s1] sm:$0xff]
    %v44 = vld [vmem:[%s1 + $0x8] sm:$0xff]
    %45 = vrot.lane.b32.xlu0 %v18, 16
    %v46 = vpop.permute.xlu0 %45
    %47 = vrot.lane.b32.xlu0 %v19, 16
    %v48 = vpop.permute.xlu0 %47
    %vm49 = vcmp.lt.s32.totalorder %v25, 16
    %v50 = vsel %vm49, %v46, %v48
    %v51 = vsel %vm49, %v48, %v46
    %s52 = scalar_lea.vmem %s2, 2
    %v53 = vld [vmem:[%s52] sm:$0x3]
    %v55 = vlaneseq
    %v56 = vshrl.u32 %v55, 7
    %v57 = vsub.s32 0, %v56
    %v58 = vrot.slane %v53, %v57
    %v59 = vlaneseq
    %v60 = vshrl.u32 %v59, 7
    %v61 = vsub.s32 1, %v60
    %v62 = vrot.slane %v53, %v61
    %v65 = vmul.f32 %v51, %v58
    %v66 = vmul.f32 %v50, %v62
    %s67 = scalar_lea.vmem %s1, 16
    %v68 = vld [vmem:[%s67] sm:$0xff]
    %v69 = vld [vmem:[%s67 + $0x8] sm:$0xff]
    %vm70 = vcmask 64512
    %v72 = vsel %vm70, %v68, 0
    %v75 = vsel %vm70, %v69, 0
    %77 = vmatprep.subr.mxu0 %v66
    %78 = vmatpush1.msra.mxu0 %v65
    %79 = vmatprep.subr.mxu0 0.0
    %80 = vmatpush1.msra.mxu0 0.0
    %81 = vmatprep.subr.mxu0 0.0
    %82 = vmatpush1.msra.mxu0 0.0
    %83 = vmatprep.subr.mxu0 0.0
    %84 = vmatpush1.msra.mxu0 0.0
    %85 = vmatprep.subr.mxu0 0.0
    %86 = vmatpush1.msra.mxu0 0.0
    %87 = vmatprep.subr.mxu0 0.0
    %88 = vmatpush1.msra.mxu0 0.0
    %89 = vmatprep.subr.mxu0 0.0
    %90 = vmatpush1.msra.mxu0 0.0
    %91 = vmatprep.subr.mxu0 0.0
    %92 = vmatpush1.msra.mxu0 0.0
    %93 = vmatprep.subr.mxu0 0.0
    %94 = vmatpush1.msra.mxu0 0.0
    %95 = vmatprep.subr.mxu0 0.0
    %96 = vmatpush1.msra.mxu0 0.0
    %97 = vmatprep.subr.mxu0 0.0
    %98 = vmatpush1.msra.mxu0 0.0
    %99 = vmatprep.subr.mxu0 0.0
    %100 = vmatpush1.msra.mxu0 0.0
    %101 = vmatprep.subr.mxu0 0.0
    %102 = vmatpush1.msra.mxu0 0.0
    %103 = vmatprep.subr.mxu0 0.0
    %104 = vmatpush1.msra.mxu0 0.0
    %105 = vmatprep.subr.mxu0 0.0
    %106 = vmatpush1.msra.mxu0 0.0
    %107 = vmatprep.subr.mxu0 0.0
    %108 = vmatpush1.msra.mxu0 0.0
    %109 = vmatprep.subr.mxu0 0.0
    %110 = vmatpush1.msra.mxu0 0.0
    %111 = vmatprep.subr.mxu0 0.0
    %112 = vmatpush1.msra.mxu0 0.0
    %113 = vmatprep.subr.mxu0 0.0
    %114 = vmatpush1.msra.mxu0 0.0
    %115 = vmatprep.subr.mxu0 0.0
    %116 = vmatpush1.msra.mxu0 0.0
    %117 = vmatprep.subr.mxu0 0.0
    %118 = vmatpush1.msra.mxu0 0.0
    %119 = vmatprep.subr.mxu0 0.0
    %120 = vmatpush1.msra.mxu0 0.0
    %121 = vmatprep.subr.mxu0 0.0
    %122 = vmatpush1.msra.mxu0 0.0
    %123 = vmatprep.subr.mxu0 0.0
    %124 = vmatpush1.msra.mxu0 0.0
    %125 = vmatprep.subr.mxu0 0.0
    %126 = vmatpush1.msra.mxu0 0.0
    %127 = vmatprep.subr.mxu0 0.0
    %128 = vmatpush1.msra.mxu0 0.0
    %129 = vmatprep.subr.mxu0 0.0
    %130 = vmatpush1.msra.mxu0 0.0
    %131 = vmatprep.subr.mxu0 0.0
    %132 = vmatpush1.msra.mxu0 0.0
    %133 = vmatprep.subr.mxu0 0.0
    %134 = vmatpush1.msra.mxu0 0.0
    %135 = vmatprep.subr.mxu0 0.0
    %136 = vmatpush1.msra.mxu0 0.0
    %137 = vmatprep.subr.mxu0 0.0
    %138 = vmatpush1.msra.mxu0 0.0
    %139 = vmatprep.subr.mxu0 0.0
    %140 = vmatpush1.msra.mxu0 0.0
    %141 = vmatprep.mubr.f32.mxu0 0.0
    %142 = vmatmul.mubr.f32.gmra.mrb[0].mxu0 %v72
    %v143 = vpop.f32.mrb[0].mxu0
    %v144 = vadd.f32 0.0, %v143
    %v145 = vpop.f32.mrb[0].mxu0
    %v146 = vadd.f32 0.0, %v145
    %147 = vmatprep.mubr.f32.mxu0 0.0
    %148 = vmatmul.mubr.f32.gmra.mrb[0].mxu0 %v75
    %v149 = vpop.f32.mrb[0].mxu0
    %v150 = vadd.f32 0.0, %v149
    %v151 = vpop.f32.mrb[0].mxu0
    %v152 = vadd.f32 0.0, %v151
    %153 = vdwg.mxu0
    %v155 = vsel %vm70, %v43, 0
    %v158 = vsel %vm70, %v44, 0
    %160 = vmatprep.subr.mxu0 %v42
    %161 = vmatpush1.msra.mxu0 %v41
    %162 = vmatprep.subr.mxu0 0.0
    %163 = vmatpush1.msra.mxu0 0.0
    %164 = vmatprep.subr.mxu0 0.0
    %165 = vmatpush1.msra.mxu0 0.0
    %166 = vmatprep.subr.mxu0 0.0
    %167 = vmatpush1.msra.mxu0 0.0
    %168 = vmatprep.subr.mxu0 0.0
    %169 = vmatpush1.msra.mxu0 0.0
    %170 = vmatprep.subr.mxu0 0.0
    %171 = vmatpush1.msra.mxu0 0.0
    %172 = vmatprep.subr.mxu0 0.0
    %173 = vmatpush1.msra.mxu0 0.0
    %174 = vmatprep.subr.mxu0 0.0
    %175 = vmatpush1.msra.mxu0 0.0
    %176 = vmatprep.subr.mxu0 0.0
    %177 = vmatpush1.msra.mxu0 0.0
    %178 = vmatprep.subr.mxu0 0.0
    %179 = vmatpush1.msra.mxu0 0.0
    %180 = vmatprep.subr.mxu0 0.0
    %181 = vmatpush1.msra.mxu0 0.0
    %182 = vmatprep.subr.mxu0 0.0
    %183 = vmatpush1.msra.mxu0 0.0
    %184 = vmatprep.subr.mxu0 0.0
    %185 = vmatpush1.msra.mxu0 0.0
    %186 = vmatprep.subr.mxu0 0.0
    %187 = vmatpush1.msra.mxu0 0.0
    %188 = vmatprep.subr.mxu0 0.0
    %189 = vmatpush1.msra.mxu0 0.0
    %190 = vmatprep.subr.mxu0 0.0
    %191 = vmatpush1.msra.mxu0 0.0
    %192 = vmatprep.subr.mxu0 0.0
    %193 = vmatpush1.msra.mxu0 0.0
    %194 = vmatprep.subr.mxu0 0.0
    %195 = vmatpush1.msra.mxu0 0.0
    %196 = vmatprep.subr.mxu0 0.0
    %197 = vmatpush1.msra.mxu0 0.0
    %198 = vmatprep.subr.mxu0 0.0
    %199 = vmatpush1.msra.mxu0 0.0
    %200 = vmatprep.subr.mxu0 0.0
    %201 = vmatpush1.msra.mxu0 0.0
    %202 = vmatprep.subr.mxu0 0.0
    %203 = vmatpush1.msra.mxu0 0.0
    %204 = vmatprep.subr.mxu0 0.0
    %205 = vmatpush1.msra.mxu0 0.0
    %206 = vmatprep.subr.mxu0 0.0
    %207 = vmatpush1.msra.mxu0 0.0
    %208 = vmatprep.subr.mxu0 0.0
    %209 = vmatpush1.msra.mxu0 0.0
    %210 = vmatprep.subr.mxu0 0.0
    %211 = vmatpush1.msra.mxu0 0.0
    %212 = vmatprep.subr.mxu0 0.0
    %213 = vmatpush1.msra.mxu0 0.0
    %214 = vmatprep.subr.mxu0 0.0
    %215 = vmatpush1.msra.mxu0 0.0
    %216 = vmatprep.subr.mxu0 0.0
    %217 = vmatpush1.msra.mxu0 0.0
    %218 = vmatprep.subr.mxu0 0.0
    %219 = vmatpush1.msra.mxu0 0.0
    %220 = vmatprep.subr.mxu0 0.0
    %221 = vmatpush1.msra.mxu0 0.0
    %222 = vmatprep.subr.mxu0 0.0
    %223 = vmatpush1.msra.mxu0 0.0
    %224 = vmatprep.mubr.f32.mxu0 0.0
    %225 = vmatmul.mubr.f32.gmra.mrb[0].mxu0 %v155
    %v226 = vpop.f32.mrb[0].mxu0
    %v227 = vadd.f32 %v144, %v226
    %v228 = vpop.f32.mrb[0].mxu0
    %v229 = vadd.f32 %v146, %v228
    %230 = vmatprep.mubr.f32.mxu0 0.0
    %231 = vmatmul.mubr.f32.gmra.mrb[0].mxu0 %v158
    %v232 = vpop.f32.mrb[0].mxu0
    %v233 = vadd.f32 %v150, %v232
    %v234 = vpop.f32.mrb[0].mxu0
    %v235 = vadd.f32 %v152, %v234
    %236 = vdwg.mxu0
    %237 = vrot.lane.b32.xlu0 %v18, 15
    %v238 = vpop.permute.xlu0 %237
    %239 = vrot.lane.b32.xlu0 %v19, 15
    %v240 = vpop.permute.xlu0 %239
    %vm241 = vcmp.lt.s32.totalorder %v25, 15
    %v242 = vsel %vm241, %v238, %v240
    %v243 = vsel %vm241, %v240, %v238
    %s244 = scalar_lea.vmem %s2, 4
    %v245 = vld [vmem:[%s244] sm:$0x3]
    %v247 = vlaneseq
    %v248 = vshrl.u32 %v247, 7
    %v249 = vsub.s32 0, %v248
    %v250 = vrot.slane %v245, %v249
    %v251 = vlaneseq
    %v252 = vshrl.u32 %v251, 7
    %v253 = vsub.s32 1, %v252
    %v254 = vrot.slane %v245, %v253
    %v257 = vmul.f32 %v243, %v250
    %v258 = vmul.f32 %v242, %v254
    %s259 = scalar_lea.vmem %s1, 32
    %v260 = vld [vmem:[%s259] sm:$0xff]
    %v261 = vld [vmem:[%s259 + $0x8] sm:$0xff]
    %v263 = vsel %vm70, %v260, 0
    %v266 = vsel %vm70, %v261, 0
    %268 = vmatprep.subr.mxu0 %v258
    %269 = vmatpush1.msra.mxu0 %v257
    %270 = vmatprep.subr.mxu0 0.0
    %271 = vmatpush1.msra.mxu0 0.0
    %272 = vmatprep.subr.mxu0 0.0
    %273 = vmatpush1.msra.mxu0 0.0
    %274 = vmatprep.subr.mxu0 0.0
    %275 = vmatpush1.msra.mxu0 0.0
    %276 = vmatprep.subr.mxu0 0.0
    %277 = vmatpush1.msra.mxu0 0.0
    %278 = vmatprep.subr.mxu0 0.0
    %279 = vmatpush1.msra.mxu0 0.0
    %280 = vmatprep.subr.mxu0 0.0
    %281 = vmatpush1.msra.mxu0 0.0
    %282 = vmatprep.subr.mxu0 0.0
    %283 = vmatpush1.msra.mxu0 0.0
    %284 = vmatprep.subr.mxu0 0.0
    %285 = vmatpush1.msra.mxu0 0.0
    %286 = vmatprep.subr.mxu0 0.0
    %287 = vmatpush1.msra.mxu0 0.0
    %288 = vmatprep.subr.mxu0 0.0
    %289 = vmatpush1.msra.mxu0 0.0
    %290 = vmatprep.subr.mxu0 0.0
    %291 = vmatpush1.msra.mxu0 0.0
    %292 = vmatprep.subr.mxu0 0.0
    %293 = vmatpush1.msra.mxu0 0.0
    %294 = vmatprep.subr.mxu0 0.0
    %295 = vmatpush1.msra.mxu0 0.0
    %296 = vmatprep.subr.mxu0 0.0
    %297 = vmatpush1.msra.mxu0 0.0
    %298 = vmatprep.subr.mxu0 0.0
    %299 = vmatpush1.msra.mxu0 0.0
    %300 = vmatprep.subr.mxu0 0.0
    %301 = vmatpush1.msra.mxu0 0.0
    %302 = vmatprep.subr.mxu0 0.0
    %303 = vmatpush1.msra.mxu0 0.0
    %304 = vmatprep.subr.mxu0 0.0
    %305 = vmatpush1.msra.mxu0 0.0
    %306 = vmatprep.subr.mxu0 0.0
    %307 = vmatpush1.msra.mxu0 0.0
    %308 = vmatprep.subr.mxu0 0.0
    %309 = vmatpush1.msra.mxu0 0.0
    %310 = vmatprep.subr.mxu0 0.0
    %311 = vmatpush1.msra.mxu0 0.0
    %312 = vmatprep.subr.mxu0 0.0
    %313 = vmatpush1.msra.mxu0 0.0
    %314 = vmatprep.subr.mxu0 0.0
    %315 = vmatpush1.msra.mxu0 0.0
    %316 = vmatprep.subr.mxu0 0.0
    %317 = vmatpush1.msra.mxu0 0.0
    %318 = vmatprep.subr.mxu0 0.0
    %319 = vmatpush1.msra.mxu0 0.0
    %320 = vmatprep.subr.mxu0 0.0
    %321 = vmatpush1.msra.mxu0 0.0
    %322 = vmatprep.subr.mxu0 0.0
    %323 = vmatpush1.msra.mxu0 0.0
    %324 = vmatprep.subr.mxu0 0.0
    %325 = vmatpush1.msra.mxu0 0.0
    %326 = vmatprep.subr.mxu0 0.0
    %327 = vmatpush1.msra.mxu0 0.0
    %328 = vmatprep.subr.mxu0 0.0
    %329 = vmatpush1.msra.mxu0 0.0
    %330 = vmatprep.subr.mxu0 0.0
    %331 = vmatpush1.msra.mxu0 0.0
    %332 = vmatprep.mubr.f32.mxu0 0.0
    %333 = vmatmul.mubr.f32.gmra.mrb[0].mxu0 %v263
    %v334 = vpop.f32.mrb[0].mxu0
    %v335 = vadd.f32 0.0, %v334
    %v336 = vpop.f32.mrb[0].mxu0
    %v337 = vadd.f32 0.0, %v336
    %338 = vmatprep.mubr.f32.mxu0 0.0
    %339 = vmatmul.mubr.f32.gmra.mrb[0].mxu0 %v266
    %v340 = vpop.f32.mrb[0].mxu0
    %v341 = vadd.f32 0.0, %v340
    %v342 = vpop.f32.mrb[0].mxu0
    %v343 = vadd.f32 0.0, %v342
    %344 = vdwg.mxu0
    %v345 = vadd.f32 %v227, %v335
    %v346 = vadd.f32 %v229, %v337
    %v347 = vadd.f32 %v233, %v341
    %v348 = vadd.f32 %v235, %v343
    %349 = vrot.lane.b32.xlu0 %v18, 1
    %v350 = vpop.permute.xlu0 %349
    %351 = vrot.lane.b32.xlu0 %v19, 1
    %v352 = vpop.permute.xlu0 %351
    %vm353 = vcmp.lt.s32.totalorder %v25, 1
    %v354 = vsel %vm353, %v350, %v352
    %v355 = vsel %vm353, %v352, %v350
    %s356 = scalar_lea.vmem %s2, 6
    %v357 = vld [vmem:[%s356] sm:$0x3]
    %v359 = vlaneseq
    %v360 = vshrl.u32 %v359, 7
    %v361 = vsub.s32 0, %v360
    %v362 = vrot.slane %v357, %v361
    %v363 = vlaneseq
    %v364 = vshrl.u32 %v363, 7
    %v365 = vsub.s32 1, %v364
    %v366 = vrot.slane %v357, %v365
    %v369 = vmul.f32 %v355, %v362
    %v370 = vmul.f32 %v354, %v366
    %s371 = scalar_lea.vmem %s1, 48
    %v372 = vld [vmem:[%s371] sm:$0xff]
    %v373 = vld [vmem:[%s371 + $0x8] sm:$0xff]
    %v375 = vsel %vm70, %v372, 0
    %v378 = vsel %vm70, %v373, 0
    %380 = vmatprep.subr.mxu0 %v370
    %381 = vmatpush1.msra.mxu0 %v369
    %382 = vmatprep.subr.mxu0 0.0
    %383 = vmatpush1.msra.mxu0 0.0
    %384 = vmatprep.subr.mxu0 0.0
    %385 = vmatpush1.msra.mxu0 0.0
    %386 = vmatprep.subr.mxu0 0.0
    %387 = vmatpush1.msra.mxu0 0.0
    %388 = vmatprep.subr.mxu0 0.0
    %389 = vmatpush1.msra.mxu0 0.0
    %390 = vmatprep.subr.mxu0 0.0
    %391 = vmatpush1.msra.mxu0 0.0
    %392 = vmatprep.subr.mxu0 0.0
    %393 = vmatpush1.msra.mxu0 0.0
    %394 = vmatprep.subr.mxu0 0.0
    %395 = vmatpush1.msra.mxu0 0.0
    %396 = vmatprep.subr.mxu0 0.0
    %397 = vmatpush1.msra.mxu0 0.0
    %398 = vmatprep.subr.mxu0 0.0
    %399 = vmatpush1.msra.mxu0 0.0
    %400 = vmatprep.subr.mxu0 0.0
    %401 = vmatpush1.msra.mxu0 0.0
    %402 = vmatprep.subr.mxu0 0.0
    %403 = vmatpush1.msra.mxu0 0.0
    %404 = vmatprep.subr.mxu0 0.0
    %405 = vmatpush1.msra.mxu0 0.0
    %406 = vmatprep.subr.mxu0 0.0
    %407 = vmatpush1.msra.mxu0 0.0
    %408 = vmatprep.subr.mxu0 0.0
    %409 = vmatpush1.msra.mxu0 0.0
    %410 = vmatprep.subr.mxu0 0.0
    %411 = vmatpush1.msra.mxu0 0.0
    %412 = vmatprep.subr.mxu0 0.0
    %413 = vmatpush1.msra.mxu0 0.0
    %414 = vmatprep.subr.mxu0 0.0
    %415 = vmatpush1.msra.mxu0 0.0
    %416 = vmatprep.subr.mxu0 0.0
    %417 = vmatpush1.msra.mxu0 0.0
    %418 = vmatprep.subr.mxu0 0.0
    %419 = vmatpush1.msra.mxu0 0.0
    %420 = vmatprep.subr.mxu0 0.0
    %421 = vmatpush1.msra.mxu0 0.0
    %422 = vmatprep.subr.mxu0 0.0
    %423 = vmatpush1.msra.mxu0 0.0
    %424 = vmatprep.subr.mxu0 0.0
    %425 = vmatpush1.msra.mxu0 0.0
    %426 = vmatprep.subr.mxu0 0.0
    %427 = vmatpush1.msra.mxu0 0.0
    %428 = vmatprep.subr.mxu0 0.0
    %429 = vmatpush1.msra.mxu0 0.0
    %430 = vmatprep.subr.mxu0 0.0
    %431 = vmatpush1.msra.mxu0 0.0
    %432 = vmatprep.subr.mxu0 0.0
    %433 = vmatpush1.msra.mxu0 0.0
    %434 = vmatprep.subr.mxu0 0.0
    %435 = vmatpush1.msra.mxu0 0.0
    %436 = vmatprep.subr.mxu0 0.0
    %437 = vmatpush1.msra.mxu0 0.0
    %438 = vmatprep.subr.mxu0 0.0
    %439 = vmatpush1.msra.mxu0 0.0
    %440 = vmatprep.subr.mxu0 0.0
    %441 = vmatpush1.msra.mxu0 0.0
    %442 = vmatprep.subr.mxu0 0.0
    %443 = vmatpush1.msra.mxu0 0.0
    %444 = vmatprep.mubr.f32.mxu0 0.0
    %445 = vmatmul.mubr.f32.gmra.mrb[0].mxu0 %v375
    %v446 = vpop.f32.mrb[0].mxu0
    %v447 = vadd.f32 0.0, %v446
    %v448 = vpop.f32.mrb[0].mxu0
    %v449 = vadd.f32 0.0, %v448
    %450 = vmatprep.mubr.f32.mxu0 0.0
    %451 = vmatmul.mubr.f32.gmra.mrb[0].mxu0 %v378
    %v452 = vpop.f32.mrb[0].mxu0
    %v453 = vadd.f32 0.0, %v452
    %v454 = vpop.f32.mrb[0].mxu0
    %v455 = vadd.f32 0.0, %v454
    %456 = vdwg.mxu0
    %v457 = vadd.f32 %v345, %v447
    %v458 = vadd.f32 %v346, %v449
    %v459 = vadd.f32 %v347, %v453
    %v460 = vadd.f32 %v348, %v455
    %s461 = scalar_lea.vmem %s1, 64
    %v462 = vld [vmem:[%s461] sm:$0xff]
    %v463 = vld [vmem:[%s461 + $0x8] sm:$0xff]
    %v465 = vsel %vm70, %v462, 0
    %v468 = vsel %vm70, %v463, 0
    %470 = vmatprep.subr.mxu0 %v19
    %471 = vmatpush1.msra.mxu0 %v18
    %472 = vmatprep.subr.mxu0 0.0
    %473 = vmatpush1.msra.mxu0 0.0
    %474 = vmatprep.subr.mxu0 0.0
    %475 = vmatpush1.msra.mxu0 0.0
    %476 = vmatprep.subr.mxu0 0.0
    %477 = vmatpush1.msra.mxu0 0.0
    %478 = vmatprep.subr.mxu0 0.0
    %479 = vmatpush1.msra.mxu0 0.0
    %480 = vmatprep.subr.mxu0 0.0
    %481 = vmatpush1.msra.mxu0 0.0
    %482 = vmatprep.subr.mxu0 0.0
    %483 = vmatpush1.msra.mxu0 0.0
    %484 = vmatprep.subr.mxu0 0.0
    %485 = vmatpush1.msra.mxu0 0.0
    %486 = vmatprep.subr.mxu0 0.0
    %487 = vmatpush1.msra.mxu0 0.0
    %488 = vmatprep.subr.mxu0 0.0
    %489 = vmatpush1.msra.mxu0 0.0
    %490 = vmatprep.subr.mxu0 0.0
    %491 = vmatpush1.msra.mxu0 0.0
    %492 = vmatprep.subr.mxu0 0.0
    %493 = vmatpush1.msra.mxu0 0.0
    %494 = vmatprep.subr.mxu0 0.0
    %495 = vmatpush1.msra.mxu0 0.0
    %496 = vmatprep.subr.mxu0 0.0
    %497 = vmatpush1.msra.mxu0 0.0
    %498 = vmatprep.subr.mxu0 0.0
    %499 = vmatpush1.msra.mxu0 0.0
    %500 = vmatprep.subr.mxu0 0.0
    %501 = vmatpush1.msra.mxu0 0.0
    %502 = vmatprep.subr.mxu0 0.0
    %503 = vmatpush1.msra.mxu0 0.0
    %504 = vmatprep.subr.mxu0 0.0
    %505 = vmatpush1.msra.mxu0 0.0
    %506 = vmatprep.subr.mxu0 0.0
    %507 = vmatpush1.msra.mxu0 0.0
    %508 = vmatprep.subr.mxu0 0.0
    %509 = vmatpush1.msra.mxu0 0.0
    %510 = vmatprep.subr.mxu0 0.0
    %511 = vmatpush1.msra.mxu0 0.0
    %512 = vmatprep.subr.mxu0 0.0
    %513 = vmatpush1.msra.mxu0 0.0
    %514 = vmatprep.subr.mxu0 0.0
    %515 = vmatpush1.msra.mxu0 0.0
    %516 = vmatprep.subr.mxu0 0.0
    %517 = vmatpush1.msra.mxu0 0.0
    %518 = vmatprep.subr.mxu0 0.0
    %519 = vmatpush1.msra.mxu0 0.0
    %520 = vmatprep.subr.mxu0 0.0
    %521 = vmatpush1.msra.mxu0 0.0
    %522 = vmatprep.subr.mxu0 0.0
    %523 = vmatpush1.msra.mxu0 0.0
    %524 = vmatprep.subr.mxu0 0.0
    %525 = vmatpush1.msra.mxu0 0.0
    %526 = vmatprep.subr.mxu0 0.0
    %527 = vmatpush1.msra.mxu0 0.0
    %528 = vmatprep.subr.mxu0 0.0
    %529 = vmatpush1.msra.mxu0 0.0
    %530 = vmatprep.subr.mxu0 0.0
    %531 = vmatpush1.msra.mxu0 0.0
    %532 = vmatprep.subr.mxu0 0.0
    %533 = vmatpush1.msra.mxu0 0.0
    %534 = vmatprep.mubr.f32.mxu0 0.0
    %535 = vmatmul.mubr.f32.gmra.mrb[0].mxu0 %v465
    %v536 = vpop.f32.mrb[0].mxu0
    %v537 = vadd.f32 0.0, %v536
    %v538 = vpop.f32.mrb[0].mxu0
    %v539 = vadd.f32 0.0, %v538
    %540 = vmatprep.mubr.f32.mxu0 0.0
    %541 = vmatmul.mubr.f32.gmra.mrb[0].mxu0 %v468
    %v542 = vpop.f32.mrb[0].mxu0
    %v543 = vadd.f32 0.0, %v542
    %v544 = vpop.f32.mrb[0].mxu0
    %v545 = vadd.f32 0.0, %v544
    %546 = vdwg.mxu0
    %v547 = vadd.f32 %v457, %v537
    %v548 = vadd.f32 %v458, %v539
    %v549 = vadd.f32 %v459, %v543
    %v550 = vadd.f32 %v460, %v545
    %551 = vrot.lane.b32.xlu0 %v18, 127
    %v552 = vpop.permute.xlu0 %551
    %553 = vrot.lane.b32.xlu0 %v19, 127
    %v554 = vpop.permute.xlu0 %553
    %vm555 = vcmp.lt.s32.totalorder %v25, 127
    %v556 = vsel %vm555, %v552, %v554
    %v557 = vsel %vm555, %v554, %v552
    %s558 = scalar_lea.vmem %s2, 10
    %v559 = vld [vmem:[%s558] sm:$0x3]
    %v561 = vlaneseq
    %v562 = vshrl.u32 %v561, 7
    %v563 = vsub.s32 0, %v562
    %v564 = vrot.slane %v559, %v563
    %v565 = vlaneseq
    %v566 = vshrl.u32 %v565, 7
    %v567 = vsub.s32 1, %v566
    %v568 = vrot.slane %v559, %v567
    %v571 = vmul.f32 %v556, %v564
    %v572 = vmul.f32 %v557, %v568
    %s573 = scalar_lea.vmem %s1, 80
    %v574 = vld [vmem:[%s573] sm:$0xff]
    %v575 = vld [vmem:[%s573 + $0x8] sm:$0xff]
    %v577 = vsel %vm70, %v574, 0
    %v580 = vsel %vm70, %v575, 0
    %582 = vmatprep.subr.mxu0 %v572
    %583 = vmatpush1.msra.mxu0 %v571
    %584 = vmatprep.subr.mxu0 0.0
    %585 = vmatpush1.msra.mxu0 0.0
    %586 = vmatprep.subr.mxu0 0.0
    %587 = vmatpush1.msra.mxu0 0.0
    %588 = vmatprep.subr.mxu0 0.0
    %589 = vmatpush1.msra.mxu0 0.0
    %590 = vmatprep.subr.mxu0 0.0
    %591 = vmatpush1.msra.mxu0 0.0
    %592 = vmatprep.subr.mxu0 0.0
    %593 = vmatpush1.msra.mxu0 0.0
    %594 = vmatprep.subr.mxu0 0.0
    %595 = vmatpush1.msra.mxu0 0.0
    %596 = vmatprep.subr.mxu0 0.0
    %597 = vmatpush1.msra.mxu0 0.0
    %598 = vmatprep.subr.mxu0 0.0
    %599 = vmatpush1.msra.mxu0 0.0
    %600 = vmatprep.subr.mxu0 0.0
    %601 = vmatpush1.msra.mxu0 0.0
    %602 = vmatprep.subr.mxu0 0.0
    %603 = vmatpush1.msra.mxu0 0.0
    %604 = vmatprep.subr.mxu0 0.0
    %605 = vmatpush1.msra.mxu0 0.0
    %606 = vmatprep.subr.mxu0 0.0
    %607 = vmatpush1.msra.mxu0 0.0
    %608 = vmatprep.subr.mxu0 0.0
    %609 = vmatpush1.msra.mxu0 0.0
    %610 = vmatprep.subr.mxu0 0.0
    %611 = vmatpush1.msra.mxu0 0.0
    %612 = vmatprep.subr.mxu0 0.0
    %613 = vmatpush1.msra.mxu0 0.0
    %614 = vmatprep.subr.mxu0 0.0
    %615 = vmatpush1.msra.mxu0 0.0
    %616 = vmatprep.subr.mxu0 0.0
    %617 = vmatpush1.msra.mxu0 0.0
    %618 = vmatprep.subr.mxu0 0.0
    %619 = vmatpush1.msra.mxu0 0.0
    %620 = vmatprep.subr.mxu0 0.0
    %621 = vmatpush1.msra.mxu0 0.0
    %622 = vmatprep.subr.mxu0 0.0
    %623 = vmatpush1.msra.mxu0 0.0
    %624 = vmatprep.subr.mxu0 0.0
    %625 = vmatpush1.msra.mxu0 0.0
    %626 = vmatprep.subr.mxu0 0.0
    %627 = vmatpush1.msra.mxu0 0.0
    %628 = vmatprep.subr.mxu0 0.0
    %629 = vmatpush1.msra.mxu0 0.0
    %630 = vmatprep.subr.mxu0 0.0
    %631 = vmatpush1.msra.mxu0 0.0
    %632 = vmatprep.subr.mxu0 0.0
    %633 = vmatpush1.msra.mxu0 0.0
    %634 = vmatprep.subr.mxu0 0.0
    %635 = vmatpush1.msra.mxu0 0.0
    %636 = vmatprep.subr.mxu0 0.0
    %637 = vmatpush1.msra.mxu0 0.0
    %638 = vmatprep.subr.mxu0 0.0
    %639 = vmatpush1.msra.mxu0 0.0
    %640 = vmatprep.subr.mxu0 0.0
    %641 = vmatpush1.msra.mxu0 0.0
    %642 = vmatprep.subr.mxu0 0.0
    %643 = vmatpush1.msra.mxu0 0.0
    %644 = vmatprep.subr.mxu0 0.0
    %645 = vmatpush1.msra.mxu0 0.0
    %646 = vmatprep.mubr.f32.mxu0 0.0
    %647 = vmatmul.mubr.f32.gmra.mrb[0].mxu0 %v577
    %v648 = vpop.f32.mrb[0].mxu0
    %v649 = vadd.f32 0.0, %v648
    %v650 = vpop.f32.mrb[0].mxu0
    %v651 = vadd.f32 0.0, %v650
    %652 = vmatprep.mubr.f32.mxu0 0.0
    %653 = vmatmul.mubr.f32.gmra.mrb[0].mxu0 %v580
    %v654 = vpop.f32.mrb[0].mxu0
    %v655 = vadd.f32 0.0, %v654
    %v656 = vpop.f32.mrb[0].mxu0
    %v657 = vadd.f32 0.0, %v656
    %658 = vdwg.mxu0
    %v659 = vadd.f32 %v547, %v649
    %v660 = vadd.f32 %v548, %v651
    %v661 = vadd.f32 %v549, %v655
    %v662 = vadd.f32 %v550, %v657
    %663 = vrot.lane.b32.xlu0 %v18, 113
    %v664 = vpop.permute.xlu0 %663
    %665 = vrot.lane.b32.xlu0 %v19, 113
    %v666 = vpop.permute.xlu0 %665
    %vm667 = vcmp.lt.s32.totalorder %v25, 113
    %v668 = vsel %vm667, %v664, %v666
    %v669 = vsel %vm667, %v666, %v664
    %s670 = scalar_lea.vmem %s2, 12
    %v671 = vld [vmem:[%s670] sm:$0x3]
    %v673 = vlaneseq
    %v674 = vshrl.u32 %v673, 7
    %v675 = vsub.s32 0, %v674
    %v676 = vrot.slane %v671, %v675
    %v677 = vlaneseq
    %v678 = vshrl.u32 %v677, 7
    %v679 = vsub.s32 1, %v678
    %v680 = vrot.slane %v671, %v679
    %v683 = vmul.f32 %v668, %v676
    %v684 = vmul.f32 %v669, %v680
    %s685 = scalar_lea.vmem %s1, 96
    %v686 = vld [vmem:[%s685] sm:$0xff]
    %v687 = vld [vmem:[%s685 + $0x8] sm:$0xff]
    %v689 = vsel %vm70, %v686, 0
    %v692 = vsel %vm70, %v687, 0
    %694 = vmatprep.subr.mxu0 %v684
    %695 = vmatpush1.msra.mxu0 %v683
    %696 = vmatprep.subr.mxu0 0.0
    %697 = vmatpush1.msra.mxu0 0.0
    %698 = vmatprep.subr.mxu0 0.0
    %699 = vmatpush1.msra.mxu0 0.0
    %700 = vmatprep.subr.mxu0 0.0
    %701 = vmatpush1.msra.mxu0 0.0
    %702 = vmatprep.subr.mxu0 0.0
    %703 = vmatpush1.msra.mxu0 0.0
    %704 = vmatprep.subr.mxu0 0.0
    %705 = vmatpush1.msra.mxu0 0.0
    %706 = vmatprep.subr.mxu0 0.0
    %707 = vmatpush1.msra.mxu0 0.0
    %708 = vmatprep.subr.mxu0 0.0
    %709 = vmatpush1.msra.mxu0 0.0
    %710 = vmatprep.subr.mxu0 0.0
    %711 = vmatpush1.msra.mxu0 0.0
    %712 = vmatprep.subr.mxu0 0.0
    %713 = vmatpush1.msra.mxu0 0.0
    %714 = vmatprep.subr.mxu0 0.0
    %715 = vmatpush1.msra.mxu0 0.0
    %716 = vmatprep.subr.mxu0 0.0
    %717 = vmatpush1.msra.mxu0 0.0
    %718 = vmatprep.subr.mxu0 0.0
    %719 = vmatpush1.msra.mxu0 0.0
    %720 = vmatprep.subr.mxu0 0.0
    %721 = vmatpush1.msra.mxu0 0.0
    %722 = vmatprep.subr.mxu0 0.0
    %723 = vmatpush1.msra.mxu0 0.0
    %724 = vmatprep.subr.mxu0 0.0
    %725 = vmatpush1.msra.mxu0 0.0
    %726 = vmatprep.subr.mxu0 0.0
    %727 = vmatpush1.msra.mxu0 0.0
    %728 = vmatprep.subr.mxu0 0.0
    %729 = vmatpush1.msra.mxu0 0.0
    %730 = vmatprep.subr.mxu0 0.0
    %731 = vmatpush1.msra.mxu0 0.0
    %732 = vmatprep.subr.mxu0 0.0
    %733 = vmatpush1.msra.mxu0 0.0
    %734 = vmatprep.subr.mxu0 0.0
    %735 = vmatpush1.msra.mxu0 0.0
    %736 = vmatprep.subr.mxu0 0.0
    %737 = vmatpush1.msra.mxu0 0.0
    %738 = vmatprep.subr.mxu0 0.0
    %739 = vmatpush1.msra.mxu0 0.0
    %740 = vmatprep.subr.mxu0 0.0
    %741 = vmatpush1.msra.mxu0 0.0
    %742 = vmatprep.subr.mxu0 0.0
    %743 = vmatpush1.msra.mxu0 0.0
    %744 = vmatprep.subr.mxu0 0.0
    %745 = vmatpush1.msra.mxu0 0.0
    %746 = vmatprep.subr.mxu0 0.0
    %747 = vmatpush1.msra.mxu0 0.0
    %748 = vmatprep.subr.mxu0 0.0
    %749 = vmatpush1.msra.mxu0 0.0
    %750 = vmatprep.subr.mxu0 0.0
    %751 = vmatpush1.msra.mxu0 0.0
    %752 = vmatprep.subr.mxu0 0.0
    %753 = vmatpush1.msra.mxu0 0.0
    %754 = vmatprep.subr.mxu0 0.0
    %755 = vmatpush1.msra.mxu0 0.0
    %756 = vmatprep.subr.mxu0 0.0
    %757 = vmatpush1.msra.mxu0 0.0
    %758 = vmatprep.mubr.f32.mxu0 0.0
    %759 = vmatmul.mubr.f32.gmra.mrb[0].mxu0 %v689
    %v760 = vpop.f32.mrb[0].mxu0
    %v761 = vadd.f32 0.0, %v760
    %v762 = vpop.f32.mrb[0].mxu0
    %v763 = vadd.f32 0.0, %v762
    %764 = vmatprep.mubr.f32.mxu0 0.0
    %765 = vmatmul.mubr.f32.gmra.mrb[0].mxu0 %v692
    %v766 = vpop.f32.mrb[0].mxu0
    %v767 = vadd.f32 0.0, %v766
    %v768 = vpop.f32.mrb[0].mxu0
    %v769 = vadd.f32 0.0, %v768
    %770 = vdwg.mxu0
    %v771 = vadd.f32 %v659, %v761
    %v772 = vadd.f32 %v660, %v763
    %v773 = vadd.f32 %v661, %v767
    %v774 = vadd.f32 %v662, %v769
    %775 = vrot.lane.b32.xlu0 %v18, 112
    %v776 = vpop.permute.xlu0 %775
    %777 = vrot.lane.b32.xlu0 %v19, 112
    %v778 = vpop.permute.xlu0 %777
    %vm779 = vcmp.lt.s32.totalorder %v25, 112
    %v780 = vsel %vm779, %v776, %v778
    %v781 = vsel %vm779, %v778, %v776
    %s782 = scalar_lea.vmem %s2, 14
    %v783 = vld [vmem:[%s782] sm:$0x3]
    %v785 = vlaneseq
    %v786 = vshrl.u32 %v785, 7
    %v787 = vsub.s32 0, %v786
    %v788 = vrot.slane %v783, %v787
    %v789 = vlaneseq
    %v790 = vshrl.u32 %v789, 7
    %v791 = vsub.s32 1, %v790
    %v792 = vrot.slane %v783, %v791
    %v795 = vmul.f32 %v780, %v788
    %v796 = vmul.f32 %v781, %v792
    %s797 = scalar_lea.vmem %s1, 112
    %v798 = vld [vmem:[%s797] sm:$0xff]
    %v799 = vld [vmem:[%s797 + $0x8] sm:$0xff]
    %v801 = vsel %vm70, %v798, 0
    %v804 = vsel %vm70, %v799, 0
    %806 = vmatprep.subr.mxu0 %v796
    %807 = vmatpush1.msra.mxu0 %v795
    %808 = vmatprep.subr.mxu0 0.0
    %809 = vmatpush1.msra.mxu0 0.0
    %810 = vmatprep.subr.mxu0 0.0
    %811 = vmatpush1.msra.mxu0 0.0
    %812 = vmatprep.subr.mxu0 0.0
    %813 = vmatpush1.msra.mxu0 0.0
    %814 = vmatprep.subr.mxu0 0.0
    %815 = vmatpush1.msra.mxu0 0.0
    %816 = vmatprep.subr.mxu0 0.0
    %817 = vmatpush1.msra.mxu0 0.0
    %818 = vmatprep.subr.mxu0 0.0
    %819 = vmatpush1.msra.mxu0 0.0
    %820 = vmatprep.subr.mxu0 0.0
    %821 = vmatpush1.msra.mxu0 0.0
    %822 = vmatprep.subr.mxu0 0.0
    %823 = vmatpush1.msra.mxu0 0.0
    %824 = vmatprep.subr.mxu0 0.0
    %825 = vmatpush1.msra.mxu0 0.0
    %826 = vmatprep.subr.mxu0 0.0
    %827 = vmatpush1.msra.mxu0 0.0
    %828 = vmatprep.subr.mxu0 0.0
    %829 = vmatpush1.msra.mxu0 0.0
    %830 = vmatprep.subr.mxu0 0.0
    %831 = vmatpush1.msra.mxu0 0.0
    %832 = vmatprep.subr.mxu0 0.0
    %833 = vmatpush1.msra.mxu0 0.0
    %834 = vmatprep.subr.mxu0 0.0
    %835 = vmatpush1.msra.mxu0 0.0
    %836 = vmatprep.subr.mxu0 0.0
    %837 = vmatpush1.msra.mxu0 0.0
    %838 = vmatprep.subr.mxu0 0.0
    %839 = vmatpush1.msra.mxu0 0.0
    %840 = vmatprep.subr.mxu0 0.0
    %841 = vmatpush1.msra.mxu0 0.0
    %842 = vmatprep.subr.mxu0 0.0
    %843 = vmatpush1.msra.mxu0 0.0
    %844 = vmatprep.subr.mxu0 0.0
    %845 = vmatpush1.msra.mxu0 0.0
    %846 = vmatprep.subr.mxu0 0.0
    %847 = vmatpush1.msra.mxu0 0.0
    %848 = vmatprep.subr.mxu0 0.0
    %849 = vmatpush1.msra.mxu0 0.0
    %850 = vmatprep.subr.mxu0 0.0
    %851 = vmatpush1.msra.mxu0 0.0
    %852 = vmatprep.subr.mxu0 0.0
    %853 = vmatpush1.msra.mxu0 0.0
    %854 = vmatprep.subr.mxu0 0.0
    %855 = vmatpush1.msra.mxu0 0.0
    %856 = vmatprep.subr.mxu0 0.0
    %857 = vmatpush1.msra.mxu0 0.0
    %858 = vmatprep.subr.mxu0 0.0
    %859 = vmatpush1.msra.mxu0 0.0
    %860 = vmatprep.subr.mxu0 0.0
    %861 = vmatpush1.msra.mxu0 0.0
    %862 = vmatprep.subr.mxu0 0.0
    %863 = vmatpush1.msra.mxu0 0.0
    %864 = vmatprep.subr.mxu0 0.0
    %865 = vmatpush1.msra.mxu0 0.0
    %866 = vmatprep.subr.mxu0 0.0
    %867 = vmatpush1.msra.mxu0 0.0
    %868 = vmatprep.subr.mxu0 0.0
    %869 = vmatpush1.msra.mxu0 0.0
    %870 = vmatprep.mubr.f32.mxu0 0.0
    %871 = vmatmul.mubr.f32.gmra.mrb[0].mxu0 %v801
    %v872 = vpop.f32.mrb[0].mxu0
    %v873 = vadd.f32 0.0, %v872
    %v874 = vpop.f32.mrb[0].mxu0
    %v875 = vadd.f32 0.0, %v874
    %876 = vmatprep.mubr.f32.mxu0 0.0
    %877 = vmatmul.mubr.f32.gmra.mrb[0].mxu0 %v804
    %v878 = vpop.f32.mrb[0].mxu0
    %v879 = vadd.f32 0.0, %v878
    %v880 = vpop.f32.mrb[0].mxu0
    %v881 = vadd.f32 0.0, %v880
    %882 = vdwg.mxu0
    %v883 = vadd.f32 %v771, %v873
    %v884 = vadd.f32 %v772, %v875
    %v885 = vadd.f32 %v773, %v879
    %v886 = vadd.f32 %v774, %v881
    %887 = vrot.lane.b32.xlu0 %v18, 111
    %v888 = vpop.permute.xlu0 %887
    %889 = vrot.lane.b32.xlu0 %v19, 111
    %v890 = vpop.permute.xlu0 %889
    %vm891 = vcmp.lt.s32.totalorder %v25, 111
    %v892 = vsel %vm891, %v888, %v890
    %v893 = vsel %vm891, %v890, %v888
    %s894 = scalar_lea.vmem %s2, 16
    %v895 = vld [vmem:[%s894] sm:$0x3]
    %v897 = vlaneseq
    %v898 = vshrl.u32 %v897, 7
    %v899 = vsub.s32 0, %v898
    %v900 = vrot.slane %v895, %v899
    %v901 = vlaneseq
    %v902 = vshrl.u32 %v901, 7
    %v903 = vsub.s32 1, %v902
    %v904 = vrot.slane %v895, %v903
    %v907 = vmul.f32 %v892, %v900
    %v908 = vmul.f32 %v893, %v904
    %s909 = scalar_lea.vmem %s1, 128
    %v910 = vld [vmem:[%s909] sm:$0xff]
    %v911 = vld [vmem:[%s909 + $0x8] sm:$0xff]
    %v913 = vsel %vm70, %v910, 0
    %v916 = vsel %vm70, %v911, 0
    %918 = vmatprep.subr.mxu0 %v908
    %919 = vmatpush1.msra.mxu0 %v907
    %920 = vmatprep.subr.mxu0 0.0
    %921 = vmatpush1.msra.mxu0 0.0
    %922 = vmatprep.subr.mxu0 0.0
    %923 = vmatpush1.msra.mxu0 0.0
    %924 = vmatprep.subr.mxu0 0.0
    %925 = vmatpush1.msra.mxu0 0.0
    %926 = vmatprep.subr.mxu0 0.0
    %927 = vmatpush1.msra.mxu0 0.0
    %928 = vmatprep.subr.mxu0 0.0
    %929 = vmatpush1.msra.mxu0 0.0
    %930 = vmatprep.subr.mxu0 0.0
    %931 = vmatpush1.msra.mxu0 0.0
    %932 = vmatprep.subr.mxu0 0.0
    %933 = vmatpush1.msra.mxu0 0.0
    %934 = vmatprep.subr.mxu0 0.0
    %935 = vmatpush1.msra.mxu0 0.0
    %936 = vmatprep.subr.mxu0 0.0
    %937 = vmatpush1.msra.mxu0 0.0
    %938 = vmatprep.subr.mxu0 0.0
    %939 = vmatpush1.msra.mxu0 0.0
    %940 = vmatprep.subr.mxu0 0.0
    %941 = vmatpush1.msra.mxu0 0.0
    %942 = vmatprep.subr.mxu0 0.0
    %943 = vmatpush1.msra.mxu0 0.0
    %944 = vmatprep.subr.mxu0 0.0
    %945 = vmatpush1.msra.mxu0 0.0
    %946 = vmatprep.subr.mxu0 0.0
    %947 = vmatpush1.msra.mxu0 0.0
    %948 = vmatprep.subr.mxu0 0.0
    %949 = vmatpush1.msra.mxu0 0.0
    %950 = vmatprep.subr.mxu0 0.0
    %951 = vmatpush1.msra.mxu0 0.0
    %952 = vmatprep.subr.mxu0 0.0
    %953 = vmatpush1.msra.mxu0 0.0
    %954 = vmatprep.subr.mxu0 0.0
    %955 = vmatpush1.msra.mxu0 0.0
    %956 = vmatprep.subr.mxu0 0.0
    %957 = vmatpush1.msra.mxu0 0.0
    %958 = vmatprep.subr.mxu0 0.0
    %959 = vmatpush1.msra.mxu0 0.0
    %960 = vmatprep.subr.mxu0 0.0
    %961 = vmatpush1.msra.mxu0 0.0
    %962 = vmatprep.subr.mxu0 0.0
    %963 = vmatpush1.msra.mxu0 0.0
    %964 = vmatprep.subr.mxu0 0.0
    %965 = vmatpush1.msra.mxu0 0.0
    %966 = vmatprep.subr.mxu0 0.0
    %967 = vmatpush1.msra.mxu0 0.0
    %968 = vmatprep.subr.mxu0 0.0
    %969 = vmatpush1.msra.mxu0 0.0
    %970 = vmatprep.subr.mxu0 0.0
    %971 = vmatpush1.msra.mxu0 0.0
    %972 = vmatprep.subr.mxu0 0.0
    %973 = vmatpush1.msra.mxu0 0.0
    %974 = vmatprep.subr.mxu0 0.0
    %975 = vmatpush1.msra.mxu0 0.0
    %976 = vmatprep.subr.mxu0 0.0
    %977 = vmatpush1.msra.mxu0 0.0
    %978 = vmatprep.subr.mxu0 0.0
    %979 = vmatpush1.msra.mxu0 0.0
    %980 = vmatprep.subr.mxu0 0.0
    %981 = vmatpush1.msra.mxu0 0.0
    %982 = vmatprep.mubr.f32.mxu0 0.0
    %983 = vmatmul.mubr.f32.gmra.mrb[0].mxu0 %v913
    %v984 = vpop.f32.mrb[0].mxu0
    %v985 = vadd.f32 0.0, %v984
    %v986 = vpop.f32.mrb[0].mxu0
    %v987 = vadd.f32 0.0, %v986
    %988 = vmatprep.mubr.f32.mxu0 0.0
    %989 = vmatmul.mubr.f32.gmra.mrb[0].mxu0 %v916
    %v990 = vpop.f32.mrb[0].mxu0
    %v991 = vadd.f32 0.0, %v990
    %v992 = vpop.f32.mrb[0].mxu0
    %v993 = vadd.f32 0.0, %v992
    %994 = vdwg.mxu0
    %v995 = vadd.f32 %v883, %v985
    %v996 = vadd.f32 %v884, %v987
    %v997 = vadd.f32 %v885, %v991
    %v998 = vadd.f32 %v886, %v993
    %v999 = vld [vmem:[%s3] sm:$0xff]
    %v1000 = vld [vmem:[%s3 + $0x8] sm:$0xff]
    %1002 = vset.pattern.permute.xlu0 0
    %1003 = vperm.xlu0 %1002, %v999
    %v1004 = vpop.permute.xlu0 %1003
    %1007 = vset.pattern.permute.xlu0 0
    %1008 = vperm.xlu0 %1007, %v1000
    %v1009 = vpop.permute.xlu0 %1008
    %v1011 = vadd.f32 %v995, %v1004
    %v1012 = vadd.f32 %v996, %v1004
    %v1013 = vadd.f32 %v997, %v1009
    %v1014 = vadd.f32 %v998, %v1009
    %v1015 = vmax.f32 %v1011, 0.0
    %v1016 = vmax.f32 %v1012, 0.0
    %v1017 = vmax.f32 %v1013, 0.0
    %v1018 = vmax.f32 %v1014, 0.0
    %1019 = vst [vmem:[#allocation2] sm:$0xff] %v1015
    %1020 = vst [vmem:[#allocation2 + $0x8] sm:$0xff] %v1016
    %1021 = vst [vmem:[#allocation2 + $0x10] sm:$0xff] %v1017
    %1022 = vst [vmem:[#allocation2 + $0x18] sm:$0xff] %v1018
    // Predicated region
    $region18: #{tpu_custom_call.1} parent=1 // pred_check
      _
    $region19: #{tpu_custom_call.1} parent=1 // pred_check_branch
      %1024 = sbr.rel (0) target = $region21
    $region20: #{tpu_custom_call.1} parent=1 // pred_region
      %s1026 = ssub.s32 512, 512
      %1027 = vsyncadd [#allocation3], %s1026
      %s1028 = sshll.u32 [#allocation2], 4
      %s1029 = int_to_ptr.vmem [resolvable:$true] %s1028
      %1034 = dma.vmem_to_hbm [thread:$0]  %s1029, 512, %s4, [#allocation3], 256, 256, 16
    $region21: #{tpu_custom_call.1} parent=1 // pred_fallthru
      _
    // Predicated region
    $region22: #{tpu_custom_call.1} parent=1 // pred_check
      _
    $region23: #{tpu_custom_call.1} parent=1 // pred_check_branch
      %1036 = sbr.rel (0) target = $region25
    $region24: #{tpu_custom_call.1} parent=1 // pred_region
      %1037 = dma.done [#allocation3], 512
    $region25: #{tpu_custom_call.1} parent=1 // pred_fallthru
      _
    %1038 = vsyncpa [#allocation3], 1

</llo_original>
